<compile_context>
chip_gen: v5e
topology: v5e:2x2
jax: 0.10.0
libtpu: 0.0.40
codegen_flags: <defaults>
</compile_context>

<pallas_src>
import jax
import jax.numpy as jnp
from jax.experimental import pallas as pl
from jax.experimental.pallas import tpu as pltpu


def _iqn_output_kernel(x_ref, sw1_ref, b1_ref, w2_ref, alpha_ref, b2_ref, o_ref):
    # x_ref:    (TILE_N, I)   rows of the flattened (B*T, I) input
    # sw1_ref:  (I, Q*I)      scale-folded first output-layer weight (all quantiles)
    # b1_ref:   (1, Q*I)      first output-layer bias, tiled per quantile
    # w2_ref:   (Q*I, Q)      block-diagonal final projection weight
    # alpha_ref, b2_ref: (1,) SMEM scalars: PReLU alpha, final bias
    # o_ref:    (TILE_N, Q)
    x = x_ref[...]
    # Hidden layer for ALL quantiles in one MXU matmul: M=TILE_N, K=I, N=Q*I.
    h = jnp.dot(x, sw1_ref[...], preferred_element_type=jnp.float32) + b1_ref[...]
    a = alpha_ref[0]
    h = jnp.where(h >= 0, h, a * h)                      # PReLU (shared alpha)
    # Final projection to one value per quantile: M=TILE_N, K=Q*I, N=Q.
    o_ref[...] = (jnp.dot(h, w2_ref[...], preferred_element_type=jnp.float32)
                  + b2_ref[0])


def implicit_quantile_forward(x, quantiles, params, *, tile_n=512,
                              compute_dtype=jnp.float32):
    """x: (B, T, input_size), quantiles: (Q,) -> (B, T, Q)."""
    f32 = jnp.float32
    B, T, I = x.shape
    Q = quantiles.shape[0]

    # ---- quantile embedding (tiny) in plain JAX -------------------------------
    cos_emb = jnp.cos(quantiles.astype(f32)[:, None]
                      * params["cos_multipliers"][None, :])          # (Q, H)
    qh = cos_emb @ params["q_w1"] + params["q_b1"]
    qa = params["q_a"].reshape(())
    qh = jnp.where(qh >= 0, qh, qa * qh)                              # PReLU
    scale = 1.0 + (qh @ params["q_w2"] + params["q_b2"])              # (Q, I)

    # ---- fold scale into the first output-layer weight ------------------------
    # h[n, q*I + i] = sum_j x[n, j] * (scale[q, j] * o_w1[j, i]) + o_b1[i]
    sw1 = scale[:, :, None] * params["o_w1"][None, :, :]              # (Q, I, I)
    sw1_cat = jnp.transpose(sw1, (1, 0, 2)).reshape(I, Q * I)         # (I, Q*I)
    b1_cat = jnp.tile(params["o_b1"], Q).reshape(1, Q * I)            # (1, Q*I)
    # block-diagonal final weight: w2_block[q*I + i, q'] = o_w2[i, 0] * (q == q')
    w2_block = (jnp.eye(Q, dtype=f32)[:, None, :]
                * params["o_w2"][None, :, :]).reshape(Q * I, Q)       # (Q*I, Q)
    alpha = params["o_a"].reshape(1).astype(f32)                      # SMEM scalar
    b2 = params["o_b2"].reshape(1).astype(f32)                        # SMEM scalar

    # ---- tile the flattened rows; pad so any B*T works -------------------------
    N = B * T
    n_tiles = pl.cdiv(N, tile_n)
    n_pad = n_tiles * tile_n
    xf = x.reshape(N, I).astype(compute_dtype)
    if n_pad != N:
        xf = jnp.pad(xf, ((0, n_pad - N), (0, 0)))
    sw1_cat = sw1_cat.astype(compute_dtype)
    w2_block = w2_block.astype(compute_dtype)

    out = pl.pallas_call(
        _iqn_output_kernel,
        out_shape=jax.ShapeDtypeStruct((n_pad, Q), f32),
        grid_spec=pltpu.PrefetchScalarGridSpec(
            num_scalar_prefetch=0,
            grid=(n_tiles,),
            in_specs=[
                pl.BlockSpec((tile_n, I), lambda i: (i, 0)),          # x rows
                pl.BlockSpec((I, Q * I), lambda i: (0, 0)),           # SW1_cat
                pl.BlockSpec((1, Q * I), lambda i: (0, 0)),           # b1_cat
                pl.BlockSpec((Q * I, Q), lambda i: (0, 0)),           # W2_block
                pl.BlockSpec(memory_space=pltpu.MemorySpace.SMEM),    # alpha
                pl.BlockSpec(memory_space=pltpu.MemorySpace.SMEM),    # b2
            ],
            out_specs=pl.BlockSpec((tile_n, Q), lambda i: (i, 0)),
        ),
        compiler_params=pltpu.CompilerParams(
            dimension_semantics=("parallel",)),
    )(xf, sw1_cat, b1_cat, w2_block, alpha, b2)

    return out[:N].reshape(B, T, Q)


def init_params(key, input_size, hidden_size):
    """Deterministic synthetic init (PyTorch-Linear-style uniform bounds)."""
    ks = jax.random.split(key, 4)

    def lin(k, fan_in, fan_out):
        kw, kb = jax.random.split(k)
        bound = 1.0 / jnp.sqrt(jnp.float32(fan_in))
        w = jax.random.uniform(kw, (fan_in, fan_out), jnp.float32, -bound, bound)
        b = jax.random.uniform(kb, (fan_out,), jnp.float32, -bound, bound)
        return w, b

    q_w1, q_b1 = lin(ks[0], hidden_size, hidden_size)
    q_w2, q_b2 = lin(ks[1], hidden_size, input_size)
    o_w1, o_b1 = lin(ks[2], input_size, input_size)
    o_w2, o_b2 = lin(ks[3], input_size, 1)
    return dict(
        q_w1=q_w1, q_b1=q_b1, q_a=jnp.full((1, 1), 0.25, jnp.float32),
        q_w2=q_w2, q_b2=q_b2,
        o_w1=o_w1, o_b1=o_b1, o_a=jnp.full((1, 1), 0.25, jnp.float32),
        o_w2=o_w2, o_b2=o_b2,
        cos_multipliers=jnp.arange(hidden_size, dtype=jnp.float32) * jnp.pi,
    )


def reference(x, quantiles, params):
    """Pure-JAX reference matching the PyTorch forward exactly."""
    cos_emb = jnp.cos(quantiles[:, None] * params["cos_multipliers"][None, :])
    h = cos_emb @ params["q_w1"] + params["q_b1"]
    a = params["q_a"][0, 0]
    h = jnp.where(h >= 0, h, a * h)
    cos_emb_tau = h @ params["q_w2"] + params["q_b2"]
    emb_inputs = x[..., None, :] * (1.0 + cos_emb_tau)
    h2 = emb_inputs @ params["o_w1"] + params["o_b1"]
    a2 = params["o_a"][0, 0]
    h2 = jnp.where(h2 >= 0, h2, a2 * h2)
    return (h2 @ params["o_w2"] + params["o_b2"])[..., 0]


if __name__ == "__main__":
    key = jax.random.PRNGKey(0)
    B, T, input_size, hidden_size, Q = 2, 8, 16, 32, 8
    kx, kq, kp = jax.random.split(key, 3)

    x = jax.random.normal(kx, (B, T, input_size), jnp.float32)
    quantiles = jax.random.uniform(kq, (Q,), jnp.float32)
    params = init_params(kp, input_size, hidden_size)

    out = implicit_quantile_forward(x, quantiles, params)
    out = jax.block_until_ready(out)

    ref = reference(x, quantiles, params)
    assert out.shape == (B, T, Q), out.shape
    err = float(jnp.max(jnp.abs(out - ref)))
    assert jnp.allclose(out, ref, atol=1e-4, rtol=1e-4), err
    print("KERNEL_OK")
</pallas_src>

<mosaic_0001>
module attributes {stable_mosaic.version = 11 : i64} {
  func.func @_iqn_output_kernel(%arg0: i32, %arg1: memref<512x16xf32, #tpu.memory_space<vmem>>, %arg2: memref<16x128xf32, #tpu.memory_space<vmem>>, %arg3: memref<1x128xf32, #tpu.memory_space<vmem>>, %arg4: memref<128x8xf32, #tpu.memory_space<vmem>>, %arg5: memref<1xf32, #tpu.memory_space<smem>>, %arg6: memref<1xf32, #tpu.memory_space<smem>>, %arg7: memref<512x8xf32, #tpu.memory_space<vmem>>) attributes {dimension_semantics = [#tpu.dimension_semantics<parallel>], iteration_bounds = array<i64: 1>, scalar_prefetch = 0 : i64, scratch_operands = 0 : i64, tpu.core_type = #tpu.core_type<tc>, window_params = [{transform_indices = @transform_0, window_bounds = array<i64: 512, 16>}, {pipeline_mode = #tpu.pipeline_mode<synchronous>, transform_indices = @transform_1, window_bounds = array<i64: 16, 128>}, {pipeline_mode = #tpu.pipeline_mode<synchronous>, transform_indices = @transform_2, window_bounds = array<i64: 1, 128>}, {pipeline_mode = #tpu.pipeline_mode<synchronous>, transform_indices = @transform_3, window_bounds = array<i64: 128, 8>}, {transform_indices = @transform_4, window_bounds = array<i64: 1>}, {transform_indices = @transform_5, window_bounds = array<i64: 1>}, {transform_indices = @transform_6, window_bounds = array<i64: 512, 8>}]} {
    %c0 = arith.constant 0 : index
    %c0_0 = arith.constant 0 : index
    %0 = vector.load %arg1[%c0, %c0_0] : memref<512x16xf32, #tpu.memory_space<vmem>>, vector<512x16xf32>
    %c0_1 = arith.constant 0 : index
    %c0_2 = arith.constant 0 : index
    %1 = vector.load %arg2[%c0_1, %c0_2] : memref<16x128xf32, #tpu.memory_space<vmem>>, vector<16x128xf32>
    %cst = arith.constant dense<0.000000e+00> : vector<512x128xf32>
    %2 = tpu.matmul %0, %1, %cst {dimension_numbers = #tpu.dot_dimension_numbers<[1], [0], [0], [1], [0, 0, 1, 1], [], []>} : vector<512x16xf32>, vector<16x128xf32>, vector<512x128xf32> -> vector<512x128xf32>
    %c0_3 = arith.constant 0 : index
    %c0_4 = arith.constant 0 : index
    %3 = vector.load %arg3[%c0_3, %c0_4] : memref<1x128xf32, #tpu.memory_space<vmem>>, vector<1x128xf32>
    %4 = vector.broadcast %3 : vector<1x128xf32> to vector<512x128xf32>
    %5 = arith.addf %2, %4 : vector<512x128xf32>
    %c0_5 = arith.constant 0 : index
    %6 = memref.load %arg5[%c0_5] : memref<1xf32, #tpu.memory_space<smem>>
    %cst_6 = arith.constant 0.000000e+00 : f32
    %7 = vector.broadcast %cst_6 : f32 to vector<512x128xf32>
    %8 = arith.cmpf oge, %5, %7 : vector<512x128xf32>
    %9 = vector.broadcast %6 : f32 to vector<512x128xf32>
    %10 = arith.mulf %9, %5 : vector<512x128xf32>
    %11 = arith.select %8, %5, %10 : vector<512x128xi1>, vector<512x128xf32>
    %c0_7 = arith.constant 0 : index
    %c0_8 = arith.constant 0 : index
    %12 = vector.load %arg4[%c0_7, %c0_8] : memref<128x8xf32, #tpu.memory_space<vmem>>, vector<128x8xf32>
    %cst_9 = arith.constant dense<0.000000e+00> : vector<512x8xf32>
    %13 = tpu.matmul %11, %12, %cst_9 {dimension_numbers = #tpu.dot_dimension_numbers<[1], [0], [0], [1], [0, 0, 1, 1], [], []>} : vector<512x128xf32>, vector<128x8xf32>, vector<512x8xf32> -> vector<512x8xf32>
    %c0_10 = arith.constant 0 : index
    %14 = memref.load %arg6[%c0_10] : memref<1xf32, #tpu.memory_space<smem>>
    %15 = vector.broadcast %14 : f32 to vector<512x8xf32>
    %16 = arith.addf %13, %15 : vector<512x8xf32>
    %c0_11 = arith.constant 0 : index
    %c0_12 = arith.constant 0 : index
    %17 = vector.load %arg7[%c0_11, %c0_12] : memref<512x8xf32, #tpu.memory_space<vmem>>, vector<512x8xf32>
    tpu.vector_store %arg7[%c0_11, %c0_12], %16 {strides = array<i32>} : memref<512x8xf32, #tpu.memory_space<vmem>>, vector<512x8xf32>,
    return
  }
  func.func @transform_0(%arg0: i32) -> (i32, i32) {
    %c0_i32 = arith.constant 0 : i32
    %c0_i32_0 = arith.constant 0 : i32
    return %arg0, %c0_i32 : i32, i32
  }
  func.func @transform_1(%arg0: i32) -> (i32, i32) {
    %c0_i32 = arith.constant 0 : i32
    %c0_i32_0 = arith.constant 0 : i32
    %c0_i32_1 = arith.constant 0 : i32
    return %c0_i32, %c0_i32_0 : i32, i32
  }
  func.func @transform_2(%arg0: i32) -> (i32, i32) {
    %c0_i32 = arith.constant 0 : i32
    %c0_i32_0 = arith.constant 0 : i32
    %c0_i32_1 = arith.constant 0 : i32
    return %c0_i32, %c0_i32_0 : i32, i32
  }
  func.func @transform_3(%arg0: i32) -> (i32, i32) {
    %c0_i32 = arith.constant 0 : i32
    %c0_i32_0 = arith.constant 0 : i32
    %c0_i32_1 = arith.constant 0 : i32
    return %c0_i32, %c0_i32_0 : i32, i32
  }
  func.func @transform_4(%arg0: i32) -> i32 {
    %c0_i32 = arith.constant 0 : i32
    %c0_i32_0 = arith.constant 0 : i32
    return %c0_i32 : i32
  }
  func.func @transform_5(%arg0: i32) -> i32 {
    %c0_i32 = arith.constant 0 : i32
    %c0_i32_0 = arith.constant 0 : i32
    return %c0_i32 : i32
  }
  func.func @transform_6(%arg0: i32) -> (i32, i32) {
    %c0_i32 = arith.constant 0 : i32
    %c0_i32_0 = arith.constant 0 : i32
    return %arg0, %c0_i32 : i32, i32
  }
}

</mosaic_0001>

<llo_original>
// kernel: tpu_custom_call.1
$region0: #{tpu_custom_call.1}
  #allocation0 [shape = 'u32[]', space=smem, size = 0x4, offset = 0x4, fixed_abs, tag = 'smem constant byte address 0x4 - core index']
  #allocation1 [shape = 'u32[72,128]{1,0:T(1,128)}', space=vmem, size = 0x9000, scoped, tag = 'internal scratch']
  #allocation2 [shape = 'f32[1]{0:T(128)S(6)}', space=smem, size = 0x200, scoped, tag = 'scoped memory for tpu_custom_call.1']
  #allocation3 [shape = 'f32[1]{0:T(128)S(6)}', space=smem, size = 0x200, scoped, tag = 'scoped memory for tpu_custom_call.1']
  %s0 = inlined_call_operand.vmem [shape: f32[512,16], index: 0, kind: input, shape index: {}]
  %s1 = inlined_call_operand.vmem [shape: f32[16,128], index: 1, kind: input, shape index: {}]
  %s2 = inlined_call_operand.vmem [shape: f32[1,128], index: 2, kind: input, shape index: {}]
  %s3 = inlined_call_operand.vmem [shape: f32[128,8], index: 3, kind: input, shape index: {}]
  %s4 = inlined_call_operand.<no memory space> [shape: f32[1], index: 4, kind: input, shape index: {}]
  %s5 = inlined_call_operand.<no memory space> [shape: f32[1], index: 5, kind: input, shape index: {}]
  %s6 = inlined_call_operand.vmem [shape: f32[512,8], index: 6, kind: output, shape index: {}]
  %s7 = sld [smem:[#allocation0]]
  $region34: #{tpu_custom_call.1} parent=0
    _
  %s9 = ssub.s32 1, %s7
  %s10 = scalar_select 0, %s9, %s7
  %11 = sst [smem:[#allocation2]] %s4
  %12 = sst [smem:[#allocation3]] %s5
  // Predicated region
  $region2: #{tpu_custom_call.1} parent=0 // pred_check
    _
  $region3: #{tpu_custom_call.1} parent=0 // pred_check_branch
    %14 = sbr.rel (0) target = $region5
  $region4: #{tpu_custom_call.1} parent=0 // pred_region
    _
  $region5: #{tpu_custom_call.1} parent=0 // pred_fallthru
    _
  // Predicated region
  $region6: #{tpu_custom_call.1} parent=0 // pred_check
    _
  $region7: #{tpu_custom_call.1} parent=0 // pred_check_branch
    %16 = sbr.rel (0) target = $region9
  $region8: #{tpu_custom_call.1} parent=0 // pred_region
    _
  $region9: #{tpu_custom_call.1} parent=0 // pred_fallthru
    _
  // Predicated region
  $region10: #{tpu_custom_call.1} parent=0 // pred_check
    _
  $region11: #{tpu_custom_call.1} parent=0 // pred_check_branch
    %18 = sbr.rel (0) target = $region13
  $region12: #{tpu_custom_call.1} parent=0 // pred_region
    _
  $region13: #{tpu_custom_call.1} parent=0 // pred_fallthru
    _
  // Predicated region
  $region14: #{tpu_custom_call.1} parent=0 // pred_check
    _
  $region15: #{tpu_custom_call.1} parent=0 // pred_check_branch
    %20 = sbr.rel (0) target = $region17
  $region16: #{tpu_custom_call.1} parent=0 // pred_region
    _
  $region17: #{tpu_custom_call.1} parent=0 // pred_fallthru
    _
  // Predicated region
  $region18: #{tpu_custom_call.1} parent=0 // pred_check
    _
  $region19: #{tpu_custom_call.1} parent=0 // pred_check_branch
    %22 = sbr.rel (0) target = $region21
  $region20: #{tpu_custom_call.1} parent=0 // pred_region
    _
  $region21: #{tpu_custom_call.1} parent=0 // pred_fallthru
    _
  // Predicated region
  $region22: #{tpu_custom_call.1} parent=0 // pred_check
    _
  $region23: #{tpu_custom_call.1} parent=0 // pred_check_branch
    %24 = sbr.rel (0) target = $region25
  $region24: #{tpu_custom_call.1} parent=0 // pred_region
    _
  $region25: #{tpu_custom_call.1} parent=0 // pred_fallthru
    _
  %v25 = vld [vmem:[%s0] sm:$0xff]
  %v26 = vld [vmem:[%s0 + $0x8] sm:$0xff]
  %v27 = vld [vmem:[%s0 + $0x10] sm:$0xff]
  %v28 = vld [vmem:[%s0 + $0x18] sm:$0xff]
  %v29 = vld [vmem:[%s0 + $0x20] sm:$0xff]
  %v30 = vld [vmem:[%s0 + $0x28] sm:$0xff]
  %v31 = vld [vmem:[%s0 + $0x30] sm:$0xff]
  %v32 = vld [vmem:[%s0 + $0x38] sm:$0xff]
  %v33 = vld [vmem:[%s0 + $0x40] sm:$0xff]
  %v34 = vld [vmem:[%s0 + $0x48] sm:$0xff]
  %v35 = vld [vmem:[%s0 + $0x50] sm:$0xff]
  %v36 = vld [vmem:[%s0 + $0x58] sm:$0xff]
  %v37 = vld [vmem:[%s0 + $0x60] sm:$0xff]
  %v38 = vld [vmem:[%s0 + $0x68] sm:$0xff]
  %v39 = vld [vmem:[%s0 + $0x70] sm:$0xff]
  %v40 = vld [vmem:[%s0 + $0x78] sm:$0xff]
  %v41 = vld [vmem:[%s0 + $0x80] sm:$0xff]
  %v42 = vld [vmem:[%s0 + $0x88] sm:$0xff]
  %v43 = vld [vmem:[%s0 + $0x90] sm:$0xff]
  %v44 = vld [vmem:[%s0 + $0x98] sm:$0xff]
  %v45 = vld [vmem:[%s0 + $0xa0] sm:$0xff]
  %v46 = vld [vmem:[%s0 + $0xa8] sm:$0xff]
  %v47 = vld [vmem:[%s0 + $0xb0] sm:$0xff]
  %v48 = vld [vmem:[%s0 + $0xb8] sm:$0xff]
  %v49 = vld [vmem:[%s0 + $0xc0] sm:$0xff]
  %v50 = vld [vmem:[%s0 + $0xc8] sm:$0xff]
  %v51 = vld [vmem:[%s0 + $0xd0] sm:$0xff]
  %v52 = vld [vmem:[%s0 + $0xd8] sm:$0xff]
  %v53 = vld [vmem:[%s0 + $0xe0] sm:$0xff]
  %v54 = vld [vmem:[%s0 + $0xe8] sm:$0xff]
  %v55 = vld [vmem:[%s0 + $0xf0] sm:$0xff]
  %v56 = vld [vmem:[%s0 + $0xf8] sm:$0xff]
  %v57 = vld [vmem:[%s0 + $0x100] sm:$0xff]
  %v58 = vld [vmem:[%s0 + $0x108] sm:$0xff]
  %v59 = vld [vmem:[%s0 + $0x110] sm:$0xff]
  %v60 = vld [vmem:[%s0 + $0x118] sm:$0xff]
  %v61 = vld [vmem:[%s0 + $0x120] sm:$0xff]
  %v62 = vld [vmem:[%s0 + $0x128] sm:$0xff]
  %v63 = vld [vmem:[%s0 + $0x130] sm:$0xff]
  %v64 = vld [vmem:[%s0 + $0x138] sm:$0xff]
  %v65 = vld [vmem:[%s0 + $0x140] sm:$0xff]
  %v66 = vld [vmem:[%s0 + $0x148] sm:$0xff]
  %v67 = vld [vmem:[%s0 + $0x150] sm:$0xff]
  %v68 = vld [vmem:[%s0 + $0x158] sm:$0xff]
  %v69 = vld [vmem:[%s0 + $0x160] sm:$0xff]
  %v70 = vld [vmem:[%s0 + $0x168] sm:$0xff]
  %v71 = vld [vmem:[%s0 + $0x170] sm:$0xff]
  %v72 = vld [vmem:[%s0 + $0x178] sm:$0xff]
  %v73 = vld [vmem:[%s0 + $0x180] sm:$0xff]
  %v74 = vld [vmem:[%s0 + $0x188] sm:$0xff]
  %v75 = vld [vmem:[%s0 + $0x190] sm:$0xff]
  %v76 = vld [vmem:[%s0 + $0x198] sm:$0xff]
  %v77 = vld [vmem:[%s0 + $0x1a0] sm:$0xff]
  %v78 = vld [vmem:[%s0 + $0x1a8] sm:$0xff]
  %v79 = vld [vmem:[%s0 + $0x1b0] sm:$0xff]
  %v80 = vld [vmem:[%s0 + $0x1b8] sm:$0xff]
  %v81 = vld [vmem:[%s0 + $0x1c0] sm:$0xff]
  %v82 = vld [vmem:[%s0 + $0x1c8] sm:$0xff]
  %v83 = vld [vmem:[%s0 + $0x1d0] sm:$0xff]
  %v84 = vld [vmem:[%s0 + $0x1d8] sm:$0xff]
  %v85 = vld [vmem:[%s0 + $0x1e0] sm:$0xff]
  %v86 = vld [vmem:[%s0 + $0x1e8] sm:$0xff]
  %v87 = vld [vmem:[%s0 + $0x1f0] sm:$0xff]
  %v88 = vld [vmem:[%s0 + $0x1f8] sm:$0xff]
  %v89 = vld [vmem:[%s1] sm:$0xff]
  %v90 = vld [vmem:[%s1 + $0x8] sm:$0xff]
  %v91 = vld [vmem:[%s2] sm:$0x1]
  %v93 = vperm.slane %v91, 0
  %vm95 = vcmask 130048
  %v97 = vsel %vm95, %v25, 0
  %v100 = vsel %vm95, %v26, 0
  %v103 = vsel %vm95, %v27, 0
  %v106 = vsel %vm95, %v28, 0
  %v109 = vsel %vm95, %v29, 0
  %v112 = vsel %vm95, %v30, 0
  %v115 = vsel %vm95, %v31, 0
  %v118 = vsel %vm95, %v32, 0
  %v121 = vsel %vm95, %v33, 0
  %v124 = vsel %vm95, %v34, 0
  %v127 = vsel %vm95, %v35, 0
  %v130 = vsel %vm95, %v36, 0
  %v133 = vsel %vm95, %v37, 0
  %v136 = vsel %vm95, %v38, 0
  %v139 = vsel %vm95, %v39, 0
  %v142 = vsel %vm95, %v40, 0
  %v145 = vsel %vm95, %v41, 0
  %v148 = vsel %vm95, %v42, 0
  %v151 = vsel %vm95, %v43, 0
  %v154 = vsel %vm95, %v44, 0
  %v157 = vsel %vm95, %v45, 0
  %v160 = vsel %vm95, %v46, 0
  %v163 = vsel %vm95, %v47, 0
  %v166 = vsel %vm95, %v48, 0
  %v169 = vsel %vm95, %v49, 0
  %v172 = vsel %vm95, %v50, 0
  %v175 = vsel %vm95, %v51, 0
  %v178 = vsel %vm95, %v52, 0
  %v181 = vsel %vm95, %v53, 0
  %v184 = vsel %vm95, %v54, 0
  %v187 = vsel %vm95, %v55, 0
  %v190 = vsel %vm95, %v56, 0
  %v193 = vsel %vm95, %v57, 0
  %v196 = vsel %vm95, %v58, 0
  %v199 = vsel %vm95, %v59, 0
  %v202 = vsel %vm95, %v60, 0
  %v205 = vsel %vm95, %v61, 0
  %v208 = vsel %vm95, %v62, 0
  %v211 = vsel %vm95, %v63, 0
  %v214 = vsel %vm95, %v64, 0
  %v217 = vsel %vm95, %v65, 0
  %v220 = vsel %vm95, %v66, 0
  %v223 = vsel %vm95, %v67, 0
  %v226 = vsel %vm95, %v68, 0
  %v229 = vsel %vm95, %v69, 0
  %v232 = vsel %vm95, %v70, 0
  %v235 = vsel %vm95, %v71, 0
  %v238 = vsel %vm95, %v72, 0
  %v241 = vsel %vm95, %v73, 0
  %v244 = vsel %vm95, %v74, 0
  %v247 = vsel %vm95, %v75, 0
  %v250 = vsel %vm95, %v76, 0
  %v253 = vsel %vm95, %v77, 0
  %v256 = vsel %vm95, %v78, 0
  %v259 = vsel %vm95, %v79, 0
  %v262 = vsel %vm95, %v80, 0
  %v265 = vsel %vm95, %v81, 0
  %v268 = vsel %vm95, %v82, 0
  %v271 = vsel %vm95, %v83, 0
  %v274 = vsel %vm95, %v84, 0
  %v277 = vsel %vm95, %v85, 0
  %v280 = vsel %vm95, %v86, 0
  %v283 = vsel %vm95, %v87, 0
  %v286 = vsel %vm95, %v88, 0
  %288 = vmatpush.msra.mxu0 0.0
  %289 = vmatpush.msra.mxu0 0.0
  %290 = vmatpush.msra.mxu0 0.0
  %291 = vmatpush.msra.mxu0 0.0
  %292 = vmatpush.msra.mxu0 0.0
  %293 = vmatpush.msra.mxu0 0.0
  %294 = vmatpush.msra.mxu0 0.0
  %295 = vmatpush.msra.mxu0 0.0
  %296 = vmatpush.msra.mxu0 0.0
  %297 = vmatpush.msra.mxu0 0.0
  %298 = vmatpush.msra.mxu0 0.0
  %299 = vmatpush.msra.mxu0 0.0
  %300 = vmatpush.msra.mxu0 0.0
  %301 = vmatpush.msra.mxu0 0.0
  %302 = vmatpush.msra.mxu0 %v90
  %303 = vmatpush.msra.mxu0 %v89
  %304 = vmatmul.f32.gmra.mxu0 %v97
  %v305 = vpop.f32.mrf.mxu0
  %v306 = vadd.f32 %v93, %v305
  %307 = vmatmul.f32.gmra.mxu0 %v100
  %v308 = vpop.f32.mrf.mxu0
  %v309 = vadd.f32 %v93, %v308
  %310 = vmatmul.f32.gmra.mxu0 %v103
  %v311 = vpop.f32.mrf.mxu0
  %v312 = vadd.f32 %v93, %v311
  %313 = vmatmul.f32.gmra.mxu0 %v106
  %v314 = vpop.f32.mrf.mxu0
  %v315 = vadd.f32 %v93, %v314
  %316 = vmatmul.f32.gmra.mxu0 %v109
  %v317 = vpop.f32.mrf.mxu0
  %v318 = vadd.f32 %v93, %v317
  %319 = vmatmul.f32.gmra.mxu0 %v112
  %v320 = vpop.f32.mrf.mxu0
  %v321 = vadd.f32 %v93, %v320
  %322 = vmatmul.f32.gmra.mxu0 %v115
  %v323 = vpop.f32.mrf.mxu0
  %v324 = vadd.f32 %v93, %v323
  %325 = vmatmul.f32.gmra.mxu0 %v118
  %v326 = vpop.f32.mrf.mxu0
  %v327 = vadd.f32 %v93, %v326
  %328 = vmatmul.f32.gmra.mxu0 %v121
  %v329 = vpop.f32.mrf.mxu0
  %v330 = vadd.f32 %v93, %v329
  %331 = vmatmul.f32.gmra.mxu0 %v124
  %v332 = vpop.f32.mrf.mxu0
  %v333 = vadd.f32 %v93, %v332
  %334 = vmatmul.f32.gmra.mxu0 %v127
  %v335 = vpop.f32.mrf.mxu0
  %v336 = vadd.f32 %v93, %v335
  %337 = vmatmul.f32.gmra.mxu0 %v130
  %v338 = vpop.f32.mrf.mxu0
  %v339 = vadd.f32 %v93, %v338
  %340 = vmatmul.f32.gmra.mxu0 %v133
  %v341 = vpop.f32.mrf.mxu0
  %v342 = vadd.f32 %v93, %v341
  %343 = vmatmul.f32.gmra.mxu0 %v136
  %v344 = vpop.f32.mrf.mxu0
  %v345 = vadd.f32 %v93, %v344
  %346 = vmatmul.f32.gmra.mxu0 %v139
  %v347 = vpop.f32.mrf.mxu0
  %v348 = vadd.f32 %v93, %v347
  %349 = vmatmul.f32.gmra.mxu0 %v142
  %v350 = vpop.f32.mrf.mxu0
  %v351 = vadd.f32 %v93, %v350
  %352 = vmatmul.f32.gmra.mxu0 %v145
  %v353 = vpop.f32.mrf.mxu0
  %v354 = vadd.f32 %v93, %v353
  %355 = vmatmul.f32.gmra.mxu0 %v148
  %v356 = vpop.f32.mrf.mxu0
  %v357 = vadd.f32 %v93, %v356
  %358 = vmatmul.f32.gmra.mxu0 %v151
  %v359 = vpop.f32.mrf.mxu0
  %v360 = vadd.f32 %v93, %v359
  %361 = vmatmul.f32.gmra.mxu0 %v154
  %v362 = vpop.f32.mrf.mxu0
  %v363 = vadd.f32 %v93, %v362
  %364 = vmatmul.f32.gmra.mxu0 %v157
  %v365 = vpop.f32.mrf.mxu0
  %v366 = vadd.f32 %v93, %v365
  %367 = vmatmul.f32.gmra.mxu0 %v160
  %v368 = vpop.f32.mrf.mxu0
  %v369 = vadd.f32 %v93, %v368
  %370 = vmatmul.f32.gmra.mxu0 %v163
  %v371 = vpop.f32.mrf.mxu0
  %v372 = vadd.f32 %v93, %v371
  %373 = vmatmul.f32.gmra.mxu0 %v166
  %v374 = vpop.f32.mrf.mxu0
  %v375 = vadd.f32 %v93, %v374
  %376 = vmatmul.f32.gmra.mxu0 %v169
  %v377 = vpop.f32.mrf.mxu0
  %v378 = vadd.f32 %v93, %v377
  %379 = vmatmul.f32.gmra.mxu0 %v172
  %v380 = vpop.f32.mrf.mxu0
  %v381 = vadd.f32 %v93, %v380
  %382 = vmatmul.f32.gmra.mxu0 %v175
  %v383 = vpop.f32.mrf.mxu0
  %v384 = vadd.f32 %v93, %v383
  %385 = vmatmul.f32.gmra.mxu0 %v178
  %v386 = vpop.f32.mrf.mxu0
  %v387 = vadd.f32 %v93, %v386
  %388 = vmatmul.f32.gmra.mxu0 %v181
  %v389 = vpop.f32.mrf.mxu0
  %v390 = vadd.f32 %v93, %v389
  %391 = vmatmul.f32.gmra.mxu0 %v184
  %v392 = vpop.f32.mrf.mxu0
  %v393 = vadd.f32 %v93, %v392
  %394 = vmatmul.f32.gmra.mxu0 %v187
  %v395 = vpop.f32.mrf.mxu0
  %v396 = vadd.f32 %v93, %v395
  %397 = vmatmul.f32.gmra.mxu0 %v190
  %v398 = vpop.f32.mrf.mxu0
  %v399 = vadd.f32 %v93, %v398
  %400 = vmatmul.f32.gmra.mxu0 %v193
  %v401 = vpop.f32.mrf.mxu0
  %v402 = vadd.f32 %v93, %v401
  %403 = vmatmul.f32.gmra.mxu0 %v196
  %v404 = vpop.f32.mrf.mxu0
  %v405 = vadd.f32 %v93, %v404
  %406 = vmatmul.f32.gmra.mxu0 %v199
  %v407 = vpop.f32.mrf.mxu0
  %v408 = vadd.f32 %v93, %v407
  %409 = vmatmul.f32.gmra.mxu0 %v202
  %v410 = vpop.f32.mrf.mxu0
  %v411 = vadd.f32 %v93, %v410
  %412 = vmatmul.f32.gmra.mxu0 %v205
  %v413 = vpop.f32.mrf.mxu0
  %v414 = vadd.f32 %v93, %v413
  %415 = vmatmul.f32.gmra.mxu0 %v208
  %v416 = vpop.f32.mrf.mxu0
  %v417 = vadd.f32 %v93, %v416
  %418 = vmatmul.f32.gmra.mxu0 %v211
  %v419 = vpop.f32.mrf.mxu0
  %v420 = vadd.f32 %v93, %v419
  %421 = vmatmul.f32.gmra.mxu0 %v214
  %v422 = vpop.f32.mrf.mxu0
  %v423 = vadd.f32 %v93, %v422
  %424 = vmatmul.f32.gmra.mxu0 %v217
  %v425 = vpop.f32.mrf.mxu0
  %v426 = vadd.f32 %v93, %v425
  %427 = vmatmul.f32.gmra.mxu0 %v220
  %v428 = vpop.f32.mrf.mxu0
  %v429 = vadd.f32 %v93, %v428
  %430 = vmatmul.f32.gmra.mxu0 %v223
  %v431 = vpop.f32.mrf.mxu0
  %v432 = vadd.f32 %v93, %v431
  %433 = vmatmul.f32.gmra.mxu0 %v226
  %v434 = vpop.f32.mrf.mxu0
  %v435 = vadd.f32 %v93, %v434
  %436 = vmatmul.f32.gmra.mxu0 %v229
  %v437 = vpop.f32.mrf.mxu0
  %v438 = vadd.f32 %v93, %v437
  %439 = vmatmul.f32.gmra.mxu0 %v232
  %v440 = vpop.f32.mrf.mxu0
  %v441 = vadd.f32 %v93, %v440
  %442 = vmatmul.f32.gmra.mxu0 %v235
  %v443 = vpop.f32.mrf.mxu0
  %v444 = vadd.f32 %v93, %v443
  %445 = vmatmul.f32.gmra.mxu0 %v238
  %v446 = vpop.f32.mrf.mxu0
  %v447 = vadd.f32 %v93, %v446
  %448 = vmatmul.f32.gmra.mxu0 %v241
  %v449 = vpop.f32.mrf.mxu0
  %v450 = vadd.f32 %v93, %v449
  %451 = vmatmul.f32.gmra.mxu0 %v244
  %v452 = vpop.f32.mrf.mxu0
  %v453 = vadd.f32 %v93, %v452
  %454 = vmatmul.f32.gmra.mxu0 %v247
  %v455 = vpop.f32.mrf.mxu0
  %v456 = vadd.f32 %v93, %v455
  %457 = vmatmul.f32.gmra.mxu0 %v250
  %v458 = vpop.f32.mrf.mxu0
  %v459 = vadd.f32 %v93, %v458
  %460 = vmatmul.f32.gmra.mxu0 %v253
  %v461 = vpop.f32.mrf.mxu0
  %v462 = vadd.f32 %v93, %v461
  %463 = vmatmul.f32.gmra.mxu0 %v256
  %v464 = vpop.f32.mrf.mxu0
  %v465 = vadd.f32 %v93, %v464
  %466 = vmatmul.f32.gmra.mxu0 %v259
  %v467 = vpop.f32.mrf.mxu0
  %v468 = vadd.f32 %v93, %v467
  %469 = vmatmul.f32.gmra.mxu0 %v262
  %v470 = vpop.f32.mrf.mxu0
  %v471 = vadd.f32 %v93, %v470
  %472 = vmatmul.f32.gmra.mxu0 %v265
  %v473 = vpop.f32.mrf.mxu0
  %v474 = vadd.f32 %v93, %v473
  %475 = vmatmul.f32.gmra.mxu0 %v268
  %v476 = vpop.f32.mrf.mxu0
  %v477 = vadd.f32 %v93, %v476
  %478 = vmatmul.f32.gmra.mxu0 %v271
  %v479 = vpop.f32.mrf.mxu0
  %v480 = vadd.f32 %v93, %v479
  %481 = vmatmul.f32.gmra.mxu0 %v274
  %v482 = vpop.f32.mrf.mxu0
  %v483 = vadd.f32 %v93, %v482
  %484 = vmatmul.f32.gmra.mxu0 %v277
  %v485 = vpop.f32.mrf.mxu0
  %v486 = vadd.f32 %v93, %v485
  %487 = vmatmul.f32.gmra.mxu0 %v280
  %v488 = vpop.f32.mrf.mxu0
  %v489 = vadd.f32 %v93, %v488
  %490 = vmatmul.f32.gmra.mxu0 %v283
  %v491 = vpop.f32.mrf.mxu0
  %v492 = vadd.f32 %v93, %v491
  %493 = vmatmul.f32.gmra.mxu0 %v286
  %v494 = vpop.f32.mrf.mxu0
  %v495 = vadd.f32 %v93, %v494
  %496 = vdwg.mxu0
  %s497 = sld [smem:[#allocation2]]
  %vm498 = vcmp.ge.f32.partialorder %v306, 0.0
  %vm499 = vcmp.ge.f32.partialorder %v309, 0.0
  %vm500 = vcmp.ge.f32.partialorder %v312, 0.0
  %vm501 = vcmp.ge.f32.partialorder %v315, 0.0
  %vm502 = vcmp.ge.f32.partialorder %v318, 0.0
  %vm503 = vcmp.ge.f32.partialorder %v321, 0.0
  %vm504 = vcmp.ge.f32.partialorder %v324, 0.0
  %vm505 = vcmp.ge.f32.partialorder %v327, 0.0
  %vm506 = vcmp.ge.f32.partialorder %v330, 0.0
  %vm507 = vcmp.ge.f32.partialorder %v333, 0.0
  %vm508 = vcmp.ge.f32.partialorder %v336, 0.0
  %vm509 = vcmp.ge.f32.partialorder %v339, 0.0
  %vm510 = vcmp.ge.f32.partialorder %v342, 0.0
  %vm511 = vcmp.ge.f32.partialorder %v345, 0.0
  %vm512 = vcmp.ge.f32.partialorder %v348, 0.0
  %vm513 = vcmp.ge.f32.partialorder %v351, 0.0
  %vm514 = vcmp.ge.f32.partialorder %v354, 0.0
  %vm515 = vcmp.ge.f32.partialorder %v357, 0.0
  %vm516 = vcmp.ge.f32.partialorder %v360, 0.0
  %vm517 = vcmp.ge.f32.partialorder %v363, 0.0
  %vm518 = vcmp.ge.f32.partialorder %v366, 0.0
  %vm519 = vcmp.ge.f32.partialorder %v369, 0.0
  %vm520 = vcmp.ge.f32.partialorder %v372, 0.0
  %vm521 = vcmp.ge.f32.partialorder %v375, 0.0
  %vm522 = vcmp.ge.f32.partialorder %v378, 0.0
  %vm523 = vcmp.ge.f32.partialorder %v381, 0.0
  %vm524 = vcmp.ge.f32.partialorder %v384, 0.0
  %vm525 = vcmp.ge.f32.partialorder %v387, 0.0
  %vm526 = vcmp.ge.f32.partialorder %v390, 0.0
  %vm527 = vcmp.ge.f32.partialorder %v393, 0.0
  %vm528 = vcmp.ge.f32.partialorder %v396, 0.0
  %vm529 = vcmp.ge.f32.partialorder %v399, 0.0
  %vm530 = vcmp.ge.f32.partialorder %v402, 0.0
  %vm531 = vcmp.ge.f32.partialorder %v405, 0.0
  %vm532 = vcmp.ge.f32.partialorder %v408, 0.0
  %vm533 = vcmp.ge.f32.partialorder %v411, 0.0
  %vm534 = vcmp.ge.f32.partialorder %v414, 0.0
  %vm535 = vcmp.ge.f32.partialorder %v417, 0.0
  %vm536 = vcmp.ge.f32.partialorder %v420, 0.0
  %vm537 = vcmp.ge.f32.partialorder %v423, 0.0
  %vm538 = vcmp.ge.f32.partialorder %v426, 0.0
  %vm539 = vcmp.ge.f32.partialorder %v429, 0.0
  %vm540 = vcmp.ge.f32.partialorder %v432, 0.0
  %vm541 = vcmp.ge.f32.partialorder %v435, 0.0
  %vm542 = vcmp.ge.f32.partialorder %v438, 0.0
  %vm543 = vcmp.ge.f32.partialorder %v441, 0.0
  %vm544 = vcmp.ge.f32.partialorder %v444, 0.0
  %vm545 = vcmp.ge.f32.partialorder %v447, 0.0
  %vm546 = vcmp.ge.f32.partialorder %v450, 0.0
  %vm547 = vcmp.ge.f32.partialorder %v453, 0.0
  %vm548 = vcmp.ge.f32.partialorder %v456, 0.0
  %vm549 = vcmp.ge.f32.partialorder %v459, 0.0
  %vm550 = vcmp.ge.f32.partialorder %v462, 0.0
  %vm551 = vcmp.ge.f32.partialorder %v465, 0.0
  %vm552 = vcmp.ge.f32.partialorder %v468, 0.0
  %vm553 = vcmp.ge.f32.partialorder %v471, 0.0
  %vm554 = vcmp.ge.f32.partialorder %v474, 0.0
  %vm555 = vcmp.ge.f32.partialorder %v477, 0.0
  %vm556 = vcmp.ge.f32.partialorder %v480, 0.0
  %vm557 = vcmp.ge.f32.partialorder %v483, 0.0
  %vm558 = vcmp.ge.f32.partialorder %v486, 0.0
  %vm559 = vcmp.ge.f32.partialorder %v489, 0.0
  %vm560 = vcmp.ge.f32.partialorder %v492, 0.0
  %vm561 = vcmp.ge.f32.partialorder %v495, 0.0
  %v562 = vstv %s497
  %v563 = vmul.f32 %v562, %v306
  %v564 = vmul.f32 %v562, %v309
  %v565 = vmul.f32 %v562, %v312
  %v566 = vmul.f32 %v562, %v315
  %v567 = vmul.f32 %v562, %v318
  %v568 = vmul.f32 %v562, %v321
  %v569 = vmul.f32 %v562, %v324
  %v570 = vmul.f32 %v562, %v327
  %v571 = vmul.f32 %v562, %v330
  %v572 = vmul.f32 %v562, %v333
  %v573 = vmul.f32 %v562, %v336
  %v574 = vmul.f32 %v562, %v339
  %v575 = vmul.f32 %v562, %v342
  %v576 = vmul.f32 %v562, %v345
  %v577 = vmul.f32 %v562, %v348
  %v578 = vmul.f32 %v562, %v351
  %v579 = vmul.f32 %v562, %v354
  %v580 = vmul.f32 %v562, %v357
  %v581 = vmul.f32 %v562, %v360
  %v582 = vmul.f32 %v562, %v363
  %v583 = vmul.f32 %v562, %v366
  %v584 = vmul.f32 %v562, %v369
  %v585 = vmul.f32 %v562, %v372
  %v586 = vmul.f32 %v562, %v375
  %v587 = vmul.f32 %v562, %v378
  %v588 = vmul.f32 %v562, %v381
  %v589 = vmul.f32 %v562, %v384
  %v590 = vmul.f32 %v562, %v387
  %v591 = vmul.f32 %v562, %v390
  %v592 = vmul.f32 %v562, %v393
  %v593 = vmul.f32 %v562, %v396
  %v594 = vmul.f32 %v562, %v399
  %v595 = vmul.f32 %v562, %v402
  %v596 = vmul.f32 %v562, %v405
  %v597 = vmul.f32 %v562, %v408
  %v598 = vmul.f32 %v562, %v411
  %v599 = vmul.f32 %v562, %v414
  %v600 = vmul.f32 %v562, %v417
  %v601 = vmul.f32 %v562, %v420
  %v602 = vmul.f32 %v562, %v423
  %v603 = vmul.f32 %v562, %v426
  %v604 = vmul.f32 %v562, %v429
  %v605 = vmul.f32 %v562, %v432
  %v606 = vmul.f32 %v562, %v435
  %v607 = vmul.f32 %v562, %v438
  %v608 = vmul.f32 %v562, %v441
  %v609 = vmul.f32 %v562, %v444
  %v610 = vmul.f32 %v562, %v447
  %v611 = vmul.f32 %v562, %v450
  %v612 = vmul.f32 %v562, %v453
  %v613 = vmul.f32 %v562, %v456
  %v614 = vmul.f32 %v562, %v459
  %v615 = vmul.f32 %v562, %v462
  %v616 = vmul.f32 %v562, %v465
  %v617 = vmul.f32 %v562, %v468
  %v618 = vmul.f32 %v562, %v471
  %v619 = vmul.f32 %v562, %v474
  %v620 = vmul.f32 %v562, %v477
  %v621 = vmul.f32 %v562, %v480
  %v622 = vmul.f32 %v562, %v483
  %v623 = vmul.f32 %v562, %v486
  %v624 = vmul.f32 %v562, %v489
  %v625 = vmul.f32 %v562, %v492
  %v626 = vmul.f32 %v562, %v495
  %v627 = vsel %vm498, %v306, %v563
  %v628 = vsel %vm499, %v309, %v564
  %v629 = vsel %vm500, %v312, %v565
  %v630 = vsel %vm501, %v315, %v566
  %v631 = vsel %vm502, %v318, %v567
  %v632 = vsel %vm503, %v321, %v568
  %v633 = vsel %vm504, %v324, %v569
  %v634 = vsel %vm505, %v327, %v570
  %v635 = vsel %vm506, %v330, %v571
  %v636 = vsel %vm507, %v333, %v572
  %v637 = vsel %vm508, %v336, %v573
  %v638 = vsel %vm509, %v339, %v574
  %v639 = vsel %vm510, %v342, %v575
  %v640 = vsel %vm511, %v345, %v576
  %v641 = vsel %vm512, %v348, %v577
  %v642 = vsel %vm513, %v351, %v578
  %v643 = vsel %vm514, %v354, %v579
  %v644 = vsel %vm515, %v357, %v580
  %v645 = vsel %vm516, %v360, %v581
  %v646 = vsel %vm517, %v363, %v582
  %v647 = vsel %vm518, %v366, %v583
  %v648 = vsel %vm519, %v369, %v584
  %v649 = vsel %vm520, %v372, %v585
  %v650 = vsel %vm521, %v375, %v586
  %v651 = vsel %vm522, %v378, %v587
  %v652 = vsel %vm523, %v381, %v588
  %v653 = vsel %vm524, %v384, %v589
  %v654 = vsel %vm525, %v387, %v590
  %v655 = vsel %vm526, %v390, %v591
  %v656 = vsel %vm527, %v393, %v592
  %v657 = vsel %vm528, %v396, %v593
  %v658 = vsel %vm529, %v399, %v594
  %v659 = vsel %vm530, %v402, %v595
  %v660 = vsel %vm531, %v405, %v596
  %v661 = vsel %vm532, %v408, %v597
  %v662 = vsel %vm533, %v411, %v598
  %v663 = vsel %vm534, %v414, %v599
  %v664 = vsel %vm535, %v417, %v600
  %v665 = vsel %vm536, %v420, %v601
  %v666 = vsel %vm537, %v423, %v602
  %v667 = vsel %vm538, %v426, %v603
  %v668 = vsel %vm539, %v429, %v604
  %v669 = vsel %vm540, %v432, %v605
  %v670 = vsel %vm541, %v435, %v606
  %v671 = vsel %vm542, %v438, %v607
  %v672 = vsel %vm543, %v441, %v608
  %v673 = vsel %vm544, %v444, %v609
  %v674 = vsel %vm545, %v447, %v610
  %v675 = vsel %vm546, %v450, %v611
  %v676 = vsel %vm547, %v453, %v612
  %v677 = vsel %vm548, %v456, %v613
  %v678 = vsel %vm549, %v459, %v614
  %v679 = vsel %vm550, %v462, %v615
  %v680 = vsel %vm551, %v465, %v616
  %v681 = vsel %vm552, %v468, %v617
  %v682 = vsel %vm553, %v471, %v618
  %v683 = vsel %vm554, %v474, %v619
  %v684 = vsel %vm555, %v477, %v620
  %v685 = vsel %vm556, %v480, %v621
  %v686 = vsel %vm557, %v483, %v622
  %v687 = vsel %vm558, %v486, %v623
  %v688 = vsel %vm559, %v489, %v624
  %v689 = vsel %vm560, %v492, %v625
  %v690 = vsel %vm561, %v495, %v626
  %v691 = vld [vmem:[%s3] sm:$0xff]
  %v692 = vld [vmem:[%s3 + $0x8] sm:$0xff]
  %v693 = vld [vmem:[%s3 + $0x10] sm:$0xff]
  %v694 = vld [vmem:[%s3 + $0x18] sm:$0xff]
  %v695 = vld [vmem:[%s3 + $0x20] sm:$0xff]
  %v696 = vld [vmem:[%s3 + $0x28] sm:$0xff]
  %v697 = vld [vmem:[%s3 + $0x30] sm:$0xff]
  %v698 = vld [vmem:[%s3 + $0x38] sm:$0xff]
  %v699 = vld [vmem:[%s3 + $0x40] sm:$0xff]
  %v700 = vld [vmem:[%s3 + $0x48] sm:$0xff]
  %v701 = vld [vmem:[%s3 + $0x50] sm:$0xff]
  %v702 = vld [vmem:[%s3 + $0x58] sm:$0xff]
  %v703 = vld [vmem:[%s3 + $0x60] sm:$0xff]
  %v704 = vld [vmem:[%s3 + $0x68] sm:$0xff]
  %v705 = vld [vmem:[%s3 + $0x70] sm:$0xff]
  %v706 = vld [vmem:[%s3 + $0x78] sm:$0xff]
  %s707 = sld [smem:[#allocation3]]
  %v708 = vstv %s707
  %709 = vmatpush.msra.mxu0 %v706
  %710 = vmatpush.msra.mxu0 %v705
  %711 = vmatpush.msra.mxu0 %v704
  %712 = vmatpush.msra.mxu0 %v703
  %713 = vmatpush.msra.mxu0 %v702
  %714 = vmatpush.msra.mxu0 %v701
  %715 = vmatpush.msra.mxu0 %v700
  %716 = vmatpush.msra.mxu0 %v699
  %717 = vmatpush.msra.mxu0 %v698
  %718 = vmatpush.msra.mxu0 %v697
  %719 = vmatpush.msra.mxu0 %v696
  %720 = vmatpush.msra.mxu0 %v695
  %721 = vmatpush.msra.mxu0 %v694
  %722 = vmatpush.msra.mxu0 %v693
  %723 = vmatpush.msra.mxu0 %v692
  %724 = vmatpush.msra.mxu0 %v691
  %725 = vmatmul.f32.gmra.mxu0 %v627
  %v726 = vpop.f32.mrf.mxu0
  %v727 = vadd.f32 %v708, %v726
  %728 = vmatmul.f32.gmra.mxu0 %v628
  %v729 = vpop.f32.mrf.mxu0
  %v730 = vadd.f32 %v708, %v729
  %731 = vmatmul.f32.gmra.mxu0 %v629
  %v732 = vpop.f32.mrf.mxu0
  %v733 = vadd.f32 %v708, %v732
  %734 = vmatmul.f32.gmra.mxu0 %v630
  %v735 = vpop.f32.mrf.mxu0
  %v736 = vadd.f32 %v708, %v735
  %737 = vmatmul.f32.gmra.mxu0 %v631
  %v738 = vpop.f32.mrf.mxu0
  %v739 = vadd.f32 %v708, %v738
  %740 = vmatmul.f32.gmra.mxu0 %v632
  %v741 = vpop.f32.mrf.mxu0
  %v742 = vadd.f32 %v708, %v741
  %743 = vmatmul.f32.gmra.mxu0 %v633
  %v744 = vpop.f32.mrf.mxu0
  %v745 = vadd.f32 %v708, %v744
  %746 = vmatmul.f32.gmra.mxu0 %v634
  %v747 = vpop.f32.mrf.mxu0
  %v748 = vadd.f32 %v708, %v747
  %749 = vmatmul.f32.gmra.mxu0 %v635
  %v750 = vpop.f32.mrf.mxu0
  %v751 = vadd.f32 %v708, %v750
  %752 = vmatmul.f32.gmra.mxu0 %v636
  %v753 = vpop.f32.mrf.mxu0
  %v754 = vadd.f32 %v708, %v753
  %755 = vmatmul.f32.gmra.mxu0 %v637
  %v756 = vpop.f32.mrf.mxu0
  %v757 = vadd.f32 %v708, %v756
  %758 = vmatmul.f32.gmra.mxu0 %v638
  %v759 = vpop.f32.mrf.mxu0
  %v760 = vadd.f32 %v708, %v759
  %761 = vmatmul.f32.gmra.mxu0 %v639
  %v762 = vpop.f32.mrf.mxu0
  %v763 = vadd.f32 %v708, %v762
  %764 = vmatmul.f32.gmra.mxu0 %v640
  %v765 = vpop.f32.mrf.mxu0
  %v766 = vadd.f32 %v708, %v765
  %767 = vmatmul.f32.gmra.mxu0 %v641
  %v768 = vpop.f32.mrf.mxu0
  %v769 = vadd.f32 %v708, %v768
  %770 = vmatmul.f32.gmra.mxu0 %v642
  %v771 = vpop.f32.mrf.mxu0
  %v772 = vadd.f32 %v708, %v771
  %773 = vmatmul.f32.gmra.mxu0 %v643
  %v774 = vpop.f32.mrf.mxu0
  %v775 = vadd.f32 %v708, %v774
  %776 = vmatmul.f32.gmra.mxu0 %v644
  %v777 = vpop.f32.mrf.mxu0
  %v778 = vadd.f32 %v708, %v777
  %779 = vmatmul.f32.gmra.mxu0 %v645
  %v780 = vpop.f32.mrf.mxu0
  %v781 = vadd.f32 %v708, %v780
  %782 = vmatmul.f32.gmra.mxu0 %v646
  %v783 = vpop.f32.mrf.mxu0
  %v784 = vadd.f32 %v708, %v783
  %785 = vmatmul.f32.gmra.mxu0 %v647
  %v786 = vpop.f32.mrf.mxu0
  %v787 = vadd.f32 %v708, %v786
  %788 = vmatmul.f32.gmra.mxu0 %v648
  %v789 = vpop.f32.mrf.mxu0
  %v790 = vadd.f32 %v708, %v789
  %791 = vmatmul.f32.gmra.mxu0 %v649
  %v792 = vpop.f32.mrf.mxu0
  %v793 = vadd.f32 %v708, %v792
  %794 = vmatmul.f32.gmra.mxu0 %v650
  %v795 = vpop.f32.mrf.mxu0
  %v796 = vadd.f32 %v708, %v795
  %797 = vmatmul.f32.gmra.mxu0 %v651
  %v798 = vpop.f32.mrf.mxu0
  %v799 = vadd.f32 %v708, %v798
  %800 = vmatmul.f32.gmra.mxu0 %v652
  %v801 = vpop.f32.mrf.mxu0
  %v802 = vadd.f32 %v708, %v801
  %803 = vmatmul.f32.gmra.mxu0 %v653
  %v804 = vpop.f32.mrf.mxu0
  %v805 = vadd.f32 %v708, %v804
  %806 = vmatmul.f32.gmra.mxu0 %v654
  %v807 = vpop.f32.mrf.mxu0
  %v808 = vadd.f32 %v708, %v807
  %809 = vmatmul.f32.gmra.mxu0 %v655
  %v810 = vpop.f32.mrf.mxu0
  %v811 = vadd.f32 %v708, %v810
  %812 = vmatmul.f32.gmra.mxu0 %v656
  %v813 = vpop.f32.mrf.mxu0
  %v814 = vadd.f32 %v708, %v813
  %815 = vmatmul.f32.gmra.mxu0 %v657
  %v816 = vpop.f32.mrf.mxu0
  %v817 = vadd.f32 %v708, %v816
  %818 = vmatmul.f32.gmra.mxu0 %v658
  %v819 = vpop.f32.mrf.mxu0
  %v820 = vadd.f32 %v708, %v819
  %821 = vmatmul.f32.gmra.mxu0 %v659
  %v822 = vpop.f32.mrf.mxu0
  %v823 = vadd.f32 %v708, %v822
  %824 = vmatmul.f32.gmra.mxu0 %v660
  %v825 = vpop.f32.mrf.mxu0
  %v826 = vadd.f32 %v708, %v825
  %827 = vmatmul.f32.gmra.mxu0 %v661
  %v828 = vpop.f32.mrf.mxu0
  %v829 = vadd.f32 %v708, %v828
  %830 = vmatmul.f32.gmra.mxu0 %v662
  %v831 = vpop.f32.mrf.mxu0
  %v832 = vadd.f32 %v708, %v831
  %833 = vmatmul.f32.gmra.mxu0 %v663
  %v834 = vpop.f32.mrf.mxu0
  %v835 = vadd.f32 %v708, %v834
  %836 = vmatmul.f32.gmra.mxu0 %v664
  %v837 = vpop.f32.mrf.mxu0
  %v838 = vadd.f32 %v708, %v837
  %839 = vmatmul.f32.gmra.mxu0 %v665
  %v840 = vpop.f32.mrf.mxu0
  %v841 = vadd.f32 %v708, %v840
  %842 = vmatmul.f32.gmra.mxu0 %v666
  %v843 = vpop.f32.mrf.mxu0
  %v844 = vadd.f32 %v708, %v843
  %845 = vmatmul.f32.gmra.mxu0 %v667
  %v846 = vpop.f32.mrf.mxu0
  %v847 = vadd.f32 %v708, %v846
  %848 = vmatmul.f32.gmra.mxu0 %v668
  %v849 = vpop.f32.mrf.mxu0
  %v850 = vadd.f32 %v708, %v849
  %851 = vmatmul.f32.gmra.mxu0 %v669
  %v852 = vpop.f32.mrf.mxu0
  %v853 = vadd.f32 %v708, %v852
  %854 = vmatmul.f32.gmra.mxu0 %v670
  %v855 = vpop.f32.mrf.mxu0
  %v856 = vadd.f32 %v708, %v855
  %857 = vmatmul.f32.gmra.mxu0 %v671
  %v858 = vpop.f32.mrf.mxu0
  %v859 = vadd.f32 %v708, %v858
  %860 = vmatmul.f32.gmra.mxu0 %v672
  %v861 = vpop.f32.mrf.mxu0
  %v862 = vadd.f32 %v708, %v861
  %863 = vmatmul.f32.gmra.mxu0 %v673
  %v864 = vpop.f32.mrf.mxu0
  %v865 = vadd.f32 %v708, %v864
  %866 = vmatmul.f32.gmra.mxu0 %v674
  %v867 = vpop.f32.mrf.mxu0
  %v868 = vadd.f32 %v708, %v867
  %869 = vmatmul.f32.gmra.mxu0 %v675
  %v870 = vpop.f32.mrf.mxu0
  %v871 = vadd.f32 %v708, %v870
  %872 = vmatmul.f32.gmra.mxu0 %v676
  %v873 = vpop.f32.mrf.mxu0
  %v874 = vadd.f32 %v708, %v873
  %875 = vmatmul.f32.gmra.mxu0 %v677
  %v876 = vpop.f32.mrf.mxu0
  %v877 = vadd.f32 %v708, %v876
  %878 = vmatmul.f32.gmra.mxu0 %v678
  %v879 = vpop.f32.mrf.mxu0
  %v880 = vadd.f32 %v708, %v879
  %881 = vmatmul.f32.gmra.mxu0 %v679
  %v882 = vpop.f32.mrf.mxu0
  %v883 = vadd.f32 %v708, %v882
  %884 = vmatmul.f32.gmra.mxu0 %v680
  %v885 = vpop.f32.mrf.mxu0
  %v886 = vadd.f32 %v708, %v885
  %887 = vmatmul.f32.gmra.mxu0 %v681
  %v888 = vpop.f32.mrf.mxu0
  %v889 = vadd.f32 %v708, %v888
  %890 = vmatmul.f32.gmra.mxu0 %v682
  %v891 = vpop.f32.mrf.mxu0
  %v892 = vadd.f32 %v708, %v891
  %893 = vmatmul.f32.gmra.mxu0 %v683
  %v894 = vpop.f32.mrf.mxu0
  %v895 = vadd.f32 %v708, %v894
  %896 = vmatmul.f32.gmra.mxu0 %v684
  %v897 = vpop.f32.mrf.mxu0
  %v898 = vadd.f32 %v708, %v897
  %899 = vmatmul.f32.gmra.mxu0 %v685
  %v900 = vpop.f32.mrf.mxu0
  %v901 = vadd.f32 %v708, %v900
  %902 = vmatmul.f32.gmra.mxu0 %v686
  %v903 = vpop.f32.mrf.mxu0
  %v904 = vadd.f32 %v708, %v903
  %905 = vmatmul.f32.gmra.mxu0 %v687
  %v906 = vpop.f32.mrf.mxu0
  %v907 = vadd.f32 %v708, %v906
  %908 = vmatmul.f32.gmra.mxu0 %v688
  %v909 = vpop.f32.mrf.mxu0
  %v910 = vadd.f32 %v708, %v909
  %911 = vmatmul.f32.gmra.mxu0 %v689
  %v912 = vpop.f32.mrf.mxu0
  %v913 = vadd.f32 %v708, %v912
  %914 = vmatmul.f32.gmra.mxu0 %v690
  %v915 = vpop.f32.mrf.mxu0
  %v916 = vadd.f32 %v708, %v915
  %917 = vdwg.mxu0
  %vm918 = vcmask 64512
  %919 = vst.msk [vmem:[%s6] sm:$0xff] %vm918, %v727
  %920 = vst.msk [vmem:[%s6 + $0x8] sm:$0xff] %vm918, %v730
  %921 = vst.msk [vmem:[%s6 + $0x10] sm:$0xff] %vm918, %v733
  %922 = vst.msk [vmem:[%s6 + $0x18] sm:$0xff] %vm918, %v736
  %923 = vst.msk [vmem:[%s6 + $0x20] sm:$0xff] %vm918, %v739
  %924 = vst.msk [vmem:[%s6 + $0x28] sm:$0xff] %vm918, %v742
  %925 = vst.msk [vmem:[%s6 + $0x30] sm:$0xff] %vm918, %v745
  %926 = vst.msk [vmem:[%s6 + $0x38] sm:$0xff] %vm918, %v748
  %927 = vst.msk [vmem:[%s6 + $0x40] sm:$0xff] %vm918, %v751
  %928 = vst.msk [vmem:[%s6 + $0x48] sm:$0xff] %vm918, %v754
  %929 = vst.msk [vmem:[%s6 + $0x50] sm:$0xff] %vm918, %v757
  %930 = vst.msk [vmem:[%s6 + $0x58] sm:$0xff] %vm918, %v760
  %931 = vst.msk [vmem:[%s6 + $0x60] sm:$0xff] %vm918, %v763
  %932 = vst.msk [vmem:[%s6 + $0x68] sm:$0xff] %vm918, %v766
  %933 = vst.msk [vmem:[%s6 + $0x70] sm:$0xff] %vm918, %v769
  %934 = vst.msk [vmem:[%s6 + $0x78] sm:$0xff] %vm918, %v772
  %935 = vst.msk [vmem:[%s6 + $0x80] sm:$0xff] %vm918, %v775
  %936 = vst.msk [vmem:[%s6 + $0x88] sm:$0xff] %vm918, %v778
  %937 = vst.msk [vmem:[%s6 + $0x90] sm:$0xff] %vm918, %v781
  %938 = vst.msk [vmem:[%s6 + $0x98] sm:$0xff] %vm918, %v784
  %939 = vst.msk [vmem:[%s6 + $0xa0] sm:$0xff] %vm918, %v787
  %940 = vst.msk [vmem:[%s6 + $0xa8] sm:$0xff] %vm918, %v790
  %941 = vst.msk [vmem:[%s6 + $0xb0] sm:$0xff] %vm918, %v793
  %942 = vst.msk [vmem:[%s6 + $0xb8] sm:$0xff] %vm918, %v796
  %943 = vst.msk [vmem:[%s6 + $0xc0] sm:$0xff] %vm918, %v799
  %944 = vst.msk [vmem:[%s6 + $0xc8] sm:$0xff] %vm918, %v802
  %945 = vst.msk [vmem:[%s6 + $0xd0] sm:$0xff] %vm918, %v805
  %946 = vst.msk [vmem:[%s6 + $0xd8] sm:$0xff] %vm918, %v808
  %947 = vst.msk [vmem:[%s6 + $0xe0] sm:$0xff] %vm918, %v811
  %948 = vst.msk [vmem:[%s6 + $0xe8] sm:$0xff] %vm918, %v814
  %949 = vst.msk [vmem:[%s6 + $0xf0] sm:$0xff] %vm918, %v817
  %950 = vst.msk [vmem:[%s6 + $0xf8] sm:$0xff] %vm918, %v820
  %951 = vst.msk [vmem:[%s6 + $0x100] sm:$0xff] %vm918, %v823
  %952 = vst.msk [vmem:[%s6 + $0x108] sm:$0xff] %vm918, %v826
  %953 = vst.msk [vmem:[%s6 + $0x110] sm:$0xff] %vm918, %v829
  %954 = vst.msk [vmem:[%s6 + $0x118] sm:$0xff] %vm918, %v832
  %955 = vst.msk [vmem:[%s6 + $0x120] sm:$0xff] %vm918, %v835
  %956 = vst.msk [vmem:[%s6 + $0x128] sm:$0xff] %vm918, %v838
  %957 = vst.msk [vmem:[%s6 + $0x130] sm:$0xff] %vm918, %v841
  %958 = vst.msk [vmem:[%s6 + $0x138] sm:$0xff] %vm918, %v844
  %959 = vst.msk [vmem:[%s6 + $0x140] sm:$0xff] %vm918, %v847
  %960 = vst.msk [vmem:[%s6 + $0x148] sm:$0xff] %vm918, %v850
  %961 = vst.msk [vmem:[%s6 + $0x150] sm:$0xff] %vm918, %v853
  %962 = vst.msk [vmem:[%s6 + $0x158] sm:$0xff] %vm918, %v856
  %963 = vst.msk [vmem:[%s6 + $0x160] sm:$0xff] %vm918, %v859
  %964 = vst.msk [vmem:[%s6 + $0x168] sm:$0xff] %vm918, %v862
  %965 = vst.msk [vmem:[%s6 + $0x170] sm:$0xff] %vm918, %v865
  %966 = vst.msk [vmem:[%s6 + $0x178] sm:$0xff] %vm918, %v868
  %967 = vst.msk [vmem:[%s6 + $0x180] sm:$0xff] %vm918, %v871
  %968 = vst.msk [vmem:[%s6 + $0x188] sm:$0xff] %vm918, %v874
  %969 = vst.msk [vmem:[%s6 + $0x190] sm:$0xff] %vm918, %v877
  %970 = vst.msk [vmem:[%s6 + $0x198] sm:$0xff] %vm918, %v880
  %971 = vst.msk [vmem:[%s6 + $0x1a0] sm:$0xff] %vm918, %v883
  %972 = vst.msk [vmem:[%s6 + $0x1a8] sm:$0xff] %vm918, %v886
  %973 = vst.msk [vmem:[%s6 + $0x1b0] sm:$0xff] %vm918, %v889
  %974 = vst.msk [vmem:[%s6 + $0x1b8] sm:$0xff] %vm918, %v892
  %975 = vst.msk [vmem:[%s6 + $0x1c0] sm:$0xff] %vm918, %v895
  %976 = vst.msk [vmem:[%s6 + $0x1c8] sm:$0xff] %vm918, %v898
  %977 = vst.msk [vmem:[%s6 + $0x1d0] sm:$0xff] %vm918, %v901
  %978 = vst.msk [vmem:[%s6 + $0x1d8] sm:$0xff] %vm918, %v904
  %979 = vst.msk [vmem:[%s6 + $0x1e0] sm:$0xff] %vm918, %v907
  %980 = vst.msk [vmem:[%s6 + $0x1e8] sm:$0xff] %vm918, %v910
  %981 = vst.msk [vmem:[%s6 + $0x1f0] sm:$0xff] %vm918, %v913
  %982 = vst.msk [vmem:[%s6 + $0x1f8] sm:$0xff] %vm918, %v916
  // Predicated region
  $region26: #{tpu_custom_call.1} parent=0 // pred_check
    _
  $region27: #{tpu_custom_call.1} parent=0 // pred_check_branch
    %984 = sbr.rel (0) target = $region29
  $region28: #{tpu_custom_call.1} parent=0 // pred_region
    _
  $region29: #{tpu_custom_call.1} parent=0 // pred_fallthru
    _
  // Predicated region
  $region30: #{tpu_custom_call.1} parent=0 // pred_check
    _
  $region31: #{tpu_custom_call.1} parent=0 // pred_check_branch
    %986 = sbr.rel (0) target = $region33
  $region32: #{tpu_custom_call.1} parent=0 // pred_region
    _
  $region33: #{tpu_custom_call.1} parent=0 // pred_fallthru
    _

</llo_original>
